<compile_context>
chip_gen: v7x
topology: tpu7x:2x2x1
jax: 0.10.0
libtpu: 0.0.40
codegen_flags: <defaults>
</compile_context>

<pallas_src>
import jax
import jax.numpy as jnp
from jax.experimental import pallas as pl
from jax.experimental.pallas import tpu as pltpu


def _round_up(n, m):
    return ((n + m - 1) // m) * m


def _mlp_kernel(x_ref, w1_ref, b1_ref, w2_ref, b2_ref, o_ref):
    # relu(Identity proj) -- elementwise in f32.
    h0 = jnp.maximum(x_ref[...], 0.0)
    # fc1 + relu: cast operand to the weight dtype (no-op for f32, bf16 when enabled),
    # accumulate in f32 on the MXU, bias-add + relu in f32.
    h1 = jnp.dot(h0.astype(w1_ref.dtype), w1_ref[...],
                 preferred_element_type=jnp.float32) + b1_ref[...]
    h1 = jnp.maximum(h1, 0.0)
    # fc2 (logits, no activation), f32 accumulation.
    y = jnp.dot(h1.astype(w2_ref.dtype), w2_ref[...],
                preferred_element_type=jnp.float32) + b2_ref[...]
    o_ref[...] = y.astype(o_ref.dtype)


def fc_softmax_classifier_forward(x, w1, b1, w2, b2, *, batch_tile=None,
                                  use_bf16_matmul=False):
    """x: (B, D); w1: (D, H); b1: (1, H); w2: (H, C); b2: (1, C) -> (B, C).

    Weights are stored pre-transposed as (in_features, out_features).
    """
    B, D = x.shape
    H = w1.shape[1]
    C = w2.shape[1]

    # Lane-dense padding of all feature dims.
    D_pad = _round_up(D, 128)
    H_pad = _round_up(H, 128)
    C_pad = _round_up(C, 128)

    # Batch tiling: big tiles feed the MXU; pad B to a tile multiple.
    if batch_tile is None:
        batch_tile = min(256, _round_up(B, 8))
    batch_tile = max(8, _round_up(batch_tile, 8))
    B_pad = _round_up(B, batch_tile)

    f32 = jnp.float32
    xp = jnp.pad(x.astype(f32), ((0, B_pad - B), (0, D_pad - D)))
    w1p = jnp.pad(w1.astype(f32), ((0, D_pad - D), (0, H_pad - H)))
    b1p = jnp.pad(b1.astype(f32), ((0, 0), (0, H_pad - H)))
    w2p = jnp.pad(w2.astype(f32), ((0, H_pad - H), (0, C_pad - C)))
    b2p = jnp.pad(b2.astype(f32), ((0, 0), (0, C_pad - C)))

    matmul_dtype = jnp.bfloat16 if use_bf16_matmul else jnp.float32
    w1p = w1p.astype(matmul_dtype)
    w2p = w2p.astype(matmul_dtype)

    grid = (B_pad // batch_tile,)
    out = pl.pallas_call(
        _mlp_kernel,
        out_shape=jax.ShapeDtypeStruct((B_pad, C_pad), jnp.float32),
        grid_spec=pltpu.PrefetchScalarGridSpec(
            num_scalar_prefetch=0,
            grid=grid,
            in_specs=[
                pl.BlockSpec((batch_tile, D_pad), lambda i: (i, 0)),  # x tile
                pl.BlockSpec((D_pad, H_pad), lambda i: (0, 0)),       # W1 (resident)
                pl.BlockSpec((1, H_pad), lambda i: (0, 0)),           # b1
                pl.BlockSpec((H_pad, C_pad), lambda i: (0, 0)),       # W2 (resident)
                pl.BlockSpec((1, C_pad), lambda i: (0, 0)),           # b2
            ],
            out_specs=pl.BlockSpec((batch_tile, C_pad), lambda i: (i, 0)),
        ),
        compiler_params=pltpu.CompilerParams(
            dimension_semantics=("parallel",),
        ),
    )(xp, w1p, b1p, w2p, b2p)

    # Slice away batch / class padding outside the kernel.
    return out[:B, :C]


def _torch_linear_init(key, fan_in, fan_out):
    """Deterministic init matching torch.nn.Linear: U(-1/sqrt(fan_in), 1/sqrt(fan_in)).

    Returns weight of shape (fan_in, fan_out) (already transposed) and bias (1, fan_out).
    """
    kw, kb = jax.random.split(key)
    bound = 1.0 / jnp.sqrt(jnp.float32(fan_in))
    w = jax.random.uniform(kw, (fan_in, fan_out), jnp.float32, -bound, bound)
    b = jax.random.uniform(kb, (1, fan_out), jnp.float32, -bound, bound)
    return w, b


def reference_forward(x, w1, b1, w2, b2):
    h0 = jnp.maximum(x, 0.0)
    h1 = jnp.maximum(h0 @ w1 + b1, 0.0)
    return h1 @ w2 + b2


if __name__ == "__main__":
    # Small shapes consistent with the module: proj_method='pca' => Identity proj,
    # so clf_in == input_dim. hidden_dim default 256, num_classes=2.
    # input_dim=96 deliberately non-128-multiple to exercise the wrapper padding path.
    batch = 16
    input_dim = 96
    hidden_dim = 256
    num_classes = 2

    key = jax.random.PRNGKey(0)
    kx, k1, k2 = jax.random.split(key, 3)

    x = jax.random.normal(kx, (batch, input_dim), jnp.float32)
    w1, b1 = _torch_linear_init(k1, input_dim, hidden_dim)    # fc1
    w2, b2 = _torch_linear_init(k2, hidden_dim, num_classes)  # fc2

    ref = reference_forward(x, w1, b1, w2, b2)

    # Exact f32 path (matches PyTorch numerics). batch_tile=8 -> 2 grid steps.
    out_f32 = fc_softmax_classifier_forward(x, w1, b1, w2, b2, batch_tile=8)
    out_f32 = jax.block_until_ready(out_f32)
    assert out_f32.shape == (batch, num_classes)
    assert jnp.allclose(out_f32, ref, atol=1e-5, rtol=1e-5), "f32 mismatch vs reference"

    # Fast bf16-operand path (f32 accumulation) -- looser tolerance.
    out_bf16 = fc_softmax_classifier_forward(x, w1, b1, w2, b2,
                                             use_bf16_matmul=True)
    out_bf16 = jax.block_until_ready(out_bf16)
    assert out_bf16.shape == (batch, num_classes)
    assert jnp.allclose(out_bf16, ref, atol=5e-2, rtol=5e-2), "bf16 mismatch vs reference"

    print("KERNEL_OK")
</pallas_src>

<mosaic_0001>
module attributes {stable_mosaic.version = 11 : i64} {
  func.func @_mlp_kernel(%arg0: i32, %arg1: memref<8x128xf32, #tpu.memory_space<vmem>>, %arg2: memref<128x256xf32, #tpu.memory_space<vmem>>, %arg3: memref<1x256xf32, #tpu.memory_space<vmem>>, %arg4: memref<256x128xf32, #tpu.memory_space<vmem>>, %arg5: memref<1x128xf32, #tpu.memory_space<vmem>>, %arg6: memref<8x128xf32, #tpu.memory_space<vmem>>) attributes {dimension_semantics = [#tpu.dimension_semantics<parallel>], iteration_bounds = array<i64: 2>, scalar_prefetch = 0 : i64, scratch_operands = 0 : i64, tpu.core_type = #tpu.core_type<tc>, window_params = [{transform_indices = @transform_0, window_bounds = array<i64: 8, 128>}, {pipeline_mode = #tpu.pipeline_mode<synchronous>, transform_indices = @transform_1, window_bounds = array<i64: 128, 256>}, {pipeline_mode = #tpu.pipeline_mode<synchronous>, transform_indices = @transform_2, window_bounds = array<i64: 1, 256>}, {pipeline_mode = #tpu.pipeline_mode<synchronous>, transform_indices = @transform_3, window_bounds = array<i64: 256, 128>}, {pipeline_mode = #tpu.pipeline_mode<synchronous>, transform_indices = @transform_4, window_bounds = array<i64: 1, 128>}, {transform_indices = @transform_5, window_bounds = array<i64: 8, 128>}]} {
    %c0 = arith.constant 0 : index
    %c0_0 = arith.constant 0 : index
    %0 = vector.load %arg1[%c0, %c0_0] : memref<8x128xf32, #tpu.memory_space<vmem>>, vector<8x128xf32>
    %cst = arith.constant 0.000000e+00 : f32
    %1 = vector.broadcast %cst : f32 to vector<8x128xf32>
    %2 = arith.maximumf %0, %1 : vector<8x128xf32>
    %c0_1 = arith.constant 0 : index
    %c0_2 = arith.constant 0 : index
    %3 = vector.load %arg2[%c0_1, %c0_2] : memref<128x256xf32, #tpu.memory_space<vmem>>, vector<128x256xf32>
    %cst_3 = arith.constant dense<0.000000e+00> : vector<8x256xf32>
    %4 = tpu.matmul %2, %3, %cst_3 {dimension_numbers = #tpu.dot_dimension_numbers<[1], [0], [0], [1], [0, 0, 1, 1], [], []>} : vector<8x128xf32>, vector<128x256xf32>, vector<8x256xf32> -> vector<8x256xf32>
    %c0_4 = arith.constant 0 : index
    %c0_5 = arith.constant 0 : index
    %5 = vector.load %arg3[%c0_4, %c0_5] : memref<1x256xf32, #tpu.memory_space<vmem>>, vector<1x256xf32>
    %6 = vector.broadcast %5 : vector<1x256xf32> to vector<8x256xf32>
    %7 = arith.addf %4, %6 : vector<8x256xf32>
    %cst_6 = arith.constant 0.000000e+00 : f32
    %8 = vector.broadcast %cst_6 : f32 to vector<8x256xf32>
    %9 = arith.maximumf %7, %8 : vector<8x256xf32>
    %c0_7 = arith.constant 0 : index
    %c0_8 = arith.constant 0 : index
    %10 = vector.load %arg4[%c0_7, %c0_8] : memref<256x128xf32, #tpu.memory_space<vmem>>, vector<256x128xf32>
    %cst_9 = arith.constant dense<0.000000e+00> : vector<8x128xf32>
    %11 = tpu.matmul %9, %10, %cst_9 {dimension_numbers = #tpu.dot_dimension_numbers<[1], [0], [0], [1], [0, 0, 1, 1], [], []>} : vector<8x256xf32>, vector<256x128xf32>, vector<8x128xf32> -> vector<8x128xf32>
    %c0_10 = arith.constant 0 : index
    %c0_11 = arith.constant 0 : index
    %12 = vector.load %arg5[%c0_10, %c0_11] : memref<1x128xf32, #tpu.memory_space<vmem>>, vector<1x128xf32>
    %13 = vector.broadcast %12 : vector<1x128xf32> to vector<8x128xf32>
    %14 = arith.addf %11, %13 : vector<8x128xf32>
    %c0_12 = arith.constant 0 : index
    %c0_13 = arith.constant 0 : index
    %15 = vector.load %arg6[%c0_12, %c0_13] : memref<8x128xf32, #tpu.memory_space<vmem>>, vector<8x128xf32>
    tpu.vector_store %arg6[%c0_12, %c0_13], %14 {strides = array<i32>} : memref<8x128xf32, #tpu.memory_space<vmem>>, vector<8x128xf32>,
    return
  }
  func.func @transform_0(%arg0: i32) -> (i32, i32) {
    %c0_i32 = arith.constant 0 : i32
    %c0_i32_0 = arith.constant 0 : i32
    return %arg0, %c0_i32 : i32, i32
  }
  func.func @transform_1(%arg0: i32) -> (i32, i32) {
    %c0_i32 = arith.constant 0 : i32
    %c0_i32_0 = arith.constant 0 : i32
    %c0_i32_1 = arith.constant 0 : i32
    return %c0_i32, %c0_i32_0 : i32, i32
  }
  func.func @transform_2(%arg0: i32) -> (i32, i32) {
    %c0_i32 = arith.constant 0 : i32
    %c0_i32_0 = arith.constant 0 : i32
    %c0_i32_1 = arith.constant 0 : i32
    return %c0_i32, %c0_i32_0 : i32, i32
  }
  func.func @transform_3(%arg0: i32) -> (i32, i32) {
    %c0_i32 = arith.constant 0 : i32
    %c0_i32_0 = arith.constant 0 : i32
    %c0_i32_1 = arith.constant 0 : i32
    return %c0_i32, %c0_i32_0 : i32, i32
  }
  func.func @transform_4(%arg0: i32) -> (i32, i32) {
    %c0_i32 = arith.constant 0 : i32
    %c0_i32_0 = arith.constant 0 : i32
    %c0_i32_1 = arith.constant 0 : i32
    return %c0_i32, %c0_i32_0 : i32, i32
  }
  func.func @transform_5(%arg0: i32) -> (i32, i32) {
    %c0_i32 = arith.constant 0 : i32
    %c0_i32_0 = arith.constant 0 : i32
    return %arg0, %c0_i32 : i32, i32
  }
}

</mosaic_0001>

<llo_original>
// kernel: tpu_custom_call.1
$region0: #{tpu_custom_call.1}
  #allocation0 [shape = 'u32[]', space=smem, size = 0x4, offset = 0x4, fixed_abs, tag = 'smem constant byte address 0x4 - core index']
  #allocation1 [shape = 'u32[144,128]{1,0:T(1,128)}', space=vmem, size = 0x12000, scoped, tag = 'internal scratch']
  %s0 = inlined_call_operand.hbm [shape: f32[16,128], index: 0, kind: input, shape index: {}]
  %s1 = inlined_call_operand.hbm [shape: f32[128,256], index: 1, kind: input, shape index: {}]
  %s2 = inlined_call_operand.vmem [shape: f32[1,256], index: 2, kind: input, shape index: {}]
  %s3 = inlined_call_operand.hbm [shape: f32[256,128], index: 3, kind: input, shape index: {}]
  %s4 = inlined_call_operand.vmem [shape: f32[1,128], index: 4, kind: input, shape index: {}]
  %s5 = inlined_call_operand.hbm [shape: f32[16,128], index: 5, kind: output, shape index: {}]
  %s6 = sld [smem:[#allocation0]]
  $region65: #{tpu_custom_call.1} parent=0
    _
  %s8 = ssub.s32 1, %s6
  %s9 = scalar_select 0, %s8, %s6
  $region1: #{tpu_custom_call.1} parent=0
    #allocation2 [shape = 'u8[8192]{0}', space=vmem, size = 0x2000, scoped, tag = 'input window, operand 0']
    #allocation3 [shape = 's32[2]{0}', space=sflag, size = 0x8, scoped, tag = 'scoped memory for tpu_custom_call.1']
    #allocation4 [shape = 's32[2]{0}', space=sflag, size = 0x8, scoped, tag = 'scoped memory for tpu_custom_call.1']
    #allocation5 [shape = 'u8[131072]{0}', space=vmem, size = 0x20000, scoped, tag = 'input window, operand 1, single buffered']
    #allocation6 [shape = 's32[1]{0}', space=sflag, size = 0x4, scoped, tag = 'scoped memory for tpu_custom_call.1']
    #allocation7 [shape = 'u8[131072]{0}', space=vmem, size = 0x20000, scoped, tag = 'input window, operand 3, single buffered']
    #allocation8 [shape = 'u8[8192]{0}', space=vmem, size = 0x2000, scoped, tag = 'output window, operand 0']
    %10 = vsyncpa [#allocation3], 0
    %s11 = scalar_lea.sflag [#allocation3], 1
    %12 = vsyncpa %s11, 0
    %13 = vsyncpa [#allocation6], 0
    %14 = vsyncpa [#allocation4], 0
    %s15 = scalar_lea.sflag [#allocation4], 1
    %16 = vsyncpa %s15, 0
    loop: start=0, step=1, limit=4
    $region2: #{tpu_custom_call.1} parent=1 // loop_pre_header
      _
    $region3: #{tpu_custom_call.1} parent=1 // loop_header
      %s18 = sphi 0, %s22
      %p19 = scmp.ge.s32.totalorder %s18, 4
      %s28 = sphi 0, %s30
      %s31 = sphi 0, %s28
      %s32 = sphi 0, %s31
      %s48 = sphi 0, %s32
      %s52 = sphi 0, %s52
      %s54 = sphi 0, %s52
      %s55 = sphi 0, %s54
      %s69 = sphi 0, %s55
      %s73 = sphi 0, %s73
      %s75 = sphi 0, %s73
      %s76 = sphi 0, %s75
      %s90 = sphi 0, %s76
      %s94 = sphi 0, %s94
      %s96 = sphi 0, %s94
      %s97 = sphi 0, %s96
      %s111 = sphi 0, %s97
      %s115 = sphi 0, %s115
      %s117 = sphi 0, %s115
      %s118 = sphi 0, %s117
      %s132 = sphi 0, %s118
      %s138 = sphi 0, %s140
      %s141 = sphi 0, %s138
      %s142 = sphi 0, %s141
      %s158 = sphi 0, %s142
    $region4: #{tpu_custom_call.1} parent=1 // loop_header_branch
      %21 = sbr.rel (%p19) target = $region8
    $region5: #{tpu_custom_call.1} parent=1 // loop_body
      %s23 = ssub.s32 %s18, 1
      %s24 = ssub.s32 %s18, 2
      %s25 = sadd.s32 %s18, 1
      %s26 = ssub.s32 %s18, %s25
      %p27 = scmp.eq.s32.totalorder %s26, 0
      %s29 = sadd.s32 %s28, 1
      %s30 = scalar_select %p27, %s28, %s29
      %p33 = pneg %p27
      %p34 = scmp.eq.s32.totalorder %s18, 1
      %p35 = por %p33, %p34
      %p36 = scmp.ne.s32.totalorder %s28, %s31
      %p37 = scmp.eq.s32.totalorder %s18, 0
      %p38 = por %p36, %p37
      %p39 = scmp.ne.s32.totalorder %s28, %s31
      %p40 = scmp.eq.s32.totalorder %s23, 1
      %p41 = por %p39, %p40
      %p42 = scmp.ne.s32.totalorder %s31, %s32
      %p43 = scmp.eq.s32.totalorder %s23, 0
      %p44 = por %p42, %p43
      %p45 = scmp.ne.s32.totalorder %s31, %s32
      %p46 = scmp.eq.s32.totalorder %s24, 1
      %p47 = por %p45, %p46
      %p49 = scmp.ne.s32.totalorder %s32, %s48
      %p50 = scmp.eq.s32.totalorder %s24, 0
      %p51 = por %p49, %p50
      %s53 = sadd.s32 %s52, 1
      %p56 = scmp.eq.s32.totalorder %s18, 1
      %p57 = scmp.ne.s32.totalorder %s52, %s54
      %p58 = scmp.eq.s32.totalorder %s18, 0
      %p59 = por %p57, %p58
      %p60 = scmp.ne.s32.totalorder %s52, %s54
      %p61 = scmp.eq.s32.totalorder %s23, 1
      %p62 = por %p60, %p61
      %p63 = scmp.ne.s32.totalorder %s54, %s55
      %p64 = scmp.eq.s32.totalorder %s23, 0
      %p65 = por %p63, %p64
      %p66 = scmp.ne.s32.totalorder %s54, %s55
      %p67 = scmp.eq.s32.totalorder %s24, 1
      %p68 = por %p66, %p67
      %p70 = scmp.ne.s32.totalorder %s55, %s69
      %p71 = scmp.eq.s32.totalorder %s24, 0
      %p72 = por %p70, %p71
      %s74 = sadd.s32 %s73, 1
      %p77 = scmp.eq.s32.totalorder %s18, 1
      %p78 = scmp.ne.s32.totalorder %s73, %s75
      %p79 = scmp.eq.s32.totalorder %s18, 0
      %p80 = por %p78, %p79
      %p81 = scmp.ne.s32.totalorder %s73, %s75
      %p82 = scmp.eq.s32.totalorder %s23, 1
      %p83 = por %p81, %p82
      %p84 = scmp.ne.s32.totalorder %s75, %s76
      %p85 = scmp.eq.s32.totalorder %s23, 0
      %p86 = por %p84, %p85
      %p87 = scmp.ne.s32.totalorder %s75, %s76
      %p88 = scmp.eq.s32.totalorder %s24, 1
      %p89 = por %p87, %p88
      %p91 = scmp.ne.s32.totalorder %s76, %s90
      %p92 = scmp.eq.s32.totalorder %s24, 0
      %p93 = por %p91, %p92
      %s95 = sadd.s32 %s94, 1
      %p98 = scmp.eq.s32.totalorder %s18, 1
      %p99 = scmp.ne.s32.totalorder %s94, %s96
      %p100 = scmp.eq.s32.totalorder %s18, 0
      %p101 = por %p99, %p100
      %p102 = scmp.ne.s32.totalorder %s94, %s96
      %p103 = scmp.eq.s32.totalorder %s23, 1
      %p104 = por %p102, %p103
      %p105 = scmp.ne.s32.totalorder %s96, %s97
      %p106 = scmp.eq.s32.totalorder %s23, 0
      %p107 = por %p105, %p106
      %p108 = scmp.ne.s32.totalorder %s96, %s97
      %p109 = scmp.eq.s32.totalorder %s24, 1
      %p110 = por %p108, %p109
      %p112 = scmp.ne.s32.totalorder %s97, %s111
      %p113 = scmp.eq.s32.totalorder %s24, 0
      %p114 = por %p112, %p113
      %s116 = sadd.s32 %s115, 1
      %p119 = scmp.eq.s32.totalorder %s18, 1
      %p120 = scmp.ne.s32.totalorder %s115, %s117
      %p121 = scmp.eq.s32.totalorder %s18, 0
      %p122 = por %p120, %p121
      %p123 = scmp.ne.s32.totalorder %s115, %s117
      %p124 = scmp.eq.s32.totalorder %s23, 1
      %p125 = por %p123, %p124
      %p126 = scmp.ne.s32.totalorder %s117, %s118
      %p127 = scmp.eq.s32.totalorder %s23, 0
      %p128 = por %p126, %p127
      %p129 = scmp.ne.s32.totalorder %s117, %s118
      %p130 = scmp.eq.s32.totalorder %s24, 1
      %p131 = por %p129, %p130
      %p133 = scmp.ne.s32.totalorder %s118, %s132
      %p134 = scmp.eq.s32.totalorder %s24, 0
      %p135 = por %p133, %p134
      %s136 = ssub.s32 %s18, %s25
      %p137 = scmp.eq.s32.totalorder %s136, 0
      %s139 = sadd.s32 %s138, 1
      %s140 = scalar_select %p137, %s138, %s139
      %p143 = pneg %p137
      %p144 = scmp.eq.s32.totalorder %s18, 1
      %p145 = por %p143, %p144
      %p146 = scmp.ne.s32.totalorder %s138, %s141
      %p147 = scmp.eq.s32.totalorder %s18, 0
      %p148 = por %p146, %p147
      %p149 = scmp.ne.s32.totalorder %s138, %s141
      %p150 = scmp.eq.s32.totalorder %s23, 1
      %p151 = por %p149, %p150
      %p152 = scmp.ne.s32.totalorder %s141, %s142
      %p153 = scmp.eq.s32.totalorder %s23, 0
      %p154 = por %p152, %p153
      %p155 = scmp.ne.s32.totalorder %s141, %s142
      %p156 = scmp.eq.s32.totalorder %s24, 1
      %p157 = por %p155, %p156
      %p159 = scmp.ne.s32.totalorder %s142, %s158
      %p160 = scmp.eq.s32.totalorder %s24, 0
      %p161 = por %p159, %p160
      %p162 = scmp.le.s32.totalorder 1, %s18
      %p163 = scmp.lt.s32.totalorder %s18, 3
      %p164 = pnand %p162, %p163
      %p165 = pneg %p164
      // Predicated region
      $region9: #{tpu_custom_call.1} parent=5 // pred_check
        _
      $region10: #{tpu_custom_call.1} parent=5 // pred_check_branch
        %167 = sbr.rel (%p164) target = $region12
      $region11: #{tpu_custom_call.1} parent=5 // pred_region
        %s168 = ssub.s32 %s18, 1
        // Predicated region
        $region13: #{tpu_custom_call.1} parent=11 // pred_check
          %p169 = pneg %p65
        $region14: #{tpu_custom_call.1} parent=11 // pred_check_branch
          %171 = sbr.rel (%p169) target = $region16
        $region15: #{tpu_custom_call.1} parent=11 // pred_region
          %s173 = ssub.s32 4096, 4096
          %174 = vsyncadd [#allocation6], %s173
          %s175 = sshll.u32 [#allocation5], 4
          %s176 = int_to_ptr.vmem [resolvable:$true] %s175
          %181 = dma.hbm_to_vmem [thread:$0]  %s1, 4096, %s176, [#allocation6], 256, 256, 16
        $region16: #{tpu_custom_call.1} parent=11 // pred_fallthru
          _
        // Predicated region
        $region17: #{tpu_custom_call.1} parent=11 // pred_check
          %p182 = pneg %p86
        $region18: #{tpu_custom_call.1} parent=11 // pred_check_branch
          %184 = sbr.rel (%p182) target = $region20
        $region19: #{tpu_custom_call.1} parent=11 // pred_region
          _
        $region20: #{tpu_custom_call.1} parent=11 // pred_fallthru
          _
        // Predicated region
        $region21: #{tpu_custom_call.1} parent=11 // pred_check
          %p185 = pneg %p107
        $region22: #{tpu_custom_call.1} parent=11 // pred_check_branch
          %187 = sbr.rel (%p185) target = $region24
        $region23: #{tpu_custom_call.1} parent=11 // pred_region
          %s189 = ssub.s32 4096, 4096
          %190 = vsyncadd [#allocation6], %s189
          %s191 = sshll.u32 [#allocation7], 4
          %s192 = int_to_ptr.vmem [resolvable:$true] %s191
          %197 = dma.hbm_to_vmem [thread:$0]  %s3, 4096, %s192, [#allocation6], 128, 128, 8
        $region24: #{tpu_custom_call.1} parent=11 // pred_fallthru
          _
        // Predicated region
        $region25: #{tpu_custom_call.1} parent=11 // pred_check
          %p198 = pneg %p128
        $region26: #{tpu_custom_call.1} parent=11 // pred_check_branch
          %200 = sbr.rel (%p198) target = $region28
        $region27: #{tpu_custom_call.1} parent=11 // pred_region
          _
        $region28: #{tpu_custom_call.1} parent=11 // pred_fallthru
          _
      $region12: #{tpu_custom_call.1} parent=5 // pred_fallthru
        _
      %p201 = scmp.lt.s32.totalorder %s18, 2
      // Predicated region
      $region29: #{tpu_custom_call.1} parent=5 // pred_check
        %p202 = pneg %p201
      $region30: #{tpu_custom_call.1} parent=5 // pred_check_branch
        %204 = sbr.rel (%p202) target = $region32
      $region31: #{tpu_custom_call.1} parent=5 // pred_region
        // Predicated region
        $region33: #{tpu_custom_call.1} parent=31 // pred_check
          %p205 = pneg %p38
        $region34: #{tpu_custom_call.1} parent=31 // pred_check_branch
          %207 = sbr.rel (%p205) target = $region36
        $region35: #{tpu_custom_call.1} parent=31 // pred_region
          %s208 = sand.u32 %s28, 1
          %s209 = scalar_lea.sflag [#allocation3], %s208
          %s210 = sand.u32 %s28, 1
          %s211 = smul.addr %s210, 8
          %s212 = scalar_lea.vmem [#allocation2], %s211
          %s214 = ssub.s32 128, 128
          %215 = vsyncadd %s209, %s214
          %s216 = smul.addr %s18, 128
          %s217 = scalar_lea.hbm %s0, %s216
          %s219 = sshll.u32 %s212, 4
          %s220 = int_to_ptr.vmem [resolvable:$true] %s219
          %222 = dma.hbm_to_vmem [thread:$0]  %s217, 128, %s220, %s209
        $region36: #{tpu_custom_call.1} parent=31 // pred_fallthru
          _
      $region32: #{tpu_custom_call.1} parent=5 // pred_fallthru
        _
      %p223 = scmp.le.s32.totalorder 1, %s18
      %p224 = scmp.lt.s32.totalorder %s18, 3
      %p225 = pnand %p223, %p224
      %p226 = pneg %p225
      // Predicated region
      $region37: #{tpu_custom_call.1} parent=5 // pred_check
        _
      $region38: #{tpu_custom_call.1} parent=5 // pred_check_branch
        %228 = sbr.rel (%p225) target = $region40
      $region39: #{tpu_custom_call.1} parent=5 // pred_region
        %s229 = ssub.s32 %s18, 1
        %s230 = sand.u32 %s31, 1
        %s231 = scalar_lea.sflag [#allocation3], %s230
        %s232 = sand.u32 %s31, 1
        %s233 = smul.addr %s232, 8
        %s234 = scalar_lea.vmem [#allocation2], %s233
        // Predicated region
        $region41: #{tpu_custom_call.1} parent=39 // pred_check
          %p235 = pneg %p44
        $region42: #{tpu_custom_call.1} parent=39 // pred_check_branch
          %237 = sbr.rel (%p235) target = $region44
        $region43: #{tpu_custom_call.1} parent=39 // pred_region
          %238 = dma.done %s231, 128
        $region44: #{tpu_custom_call.1} parent=39 // pred_fallthru
          _
        // Predicated region
        $region45: #{tpu_custom_call.1} parent=39 // pred_check
          %p239 = pneg %p65
        $region46: #{tpu_custom_call.1} parent=39 // pred_check_branch
          %241 = sbr.rel (%p239) target = $region48
        $region47: #{tpu_custom_call.1} parent=39 // pred_region
          %242 = dma.done [#allocation6], 4096
        $region48: #{tpu_custom_call.1} parent=39 // pred_fallthru
          _
        // Predicated region
        $region49: #{tpu_custom_call.1} parent=39 // pred_check
          %p243 = pneg %p107
        $region50: #{tpu_custom_call.1} parent=39 // pred_check_branch
          %245 = sbr.rel (%p243) target = $region52
        $region51: #{tpu_custom_call.1} parent=39 // pred_region
          %246 = dma.done [#allocation6], 4096
        $region52: #{tpu_custom_call.1} parent=39 // pred_fallthru
          _
        %s247 = sand.u32 %s31, 1
        %s248 = scalar_lea.sflag [#allocation3], %s247
        %s249 = sand.u32 %s31, 1
        %s250 = smul.addr %s249, 8
        %s251 = scalar_lea.vmem [#allocation2], %s250
        %p252 = pneg %p44
        %p253 = pneg %p41
        %p254 = pneg %p65
        %p255 = pneg %p62
        %p256 = pneg %p86
        %p257 = pneg %p83
        %p258 = pneg %p107
        %p259 = pneg %p104
        %p260 = pneg %p128
        %p261 = pneg %p125
        %p262 = pneg %p154
        %p263 = pneg %p151
        %s264 = sand.u32 %s141, 1
        %s265 = scalar_lea.sflag [#allocation4], %s264
        %s266 = sand.u32 %s141, 1
        %s267 = smul.addr %s266, 8
        %s268 = scalar_lea.vmem [#allocation8], %s267
        %v269 = vld [vmem:[%s234] sm:$0xff]
        %v270 = vmax.f32 %v269, 0.0
        %v271 = vld [vmem:[#allocation5] sm:$0xff]
        %v272 = vld [vmem:[#allocation5 + $0x8] sm:$0xff]
        %v273 = vld [vmem:[#allocation5 + $0x10] sm:$0xff]
        %v274 = vld [vmem:[#allocation5 + $0x18] sm:$0xff]
        %v275 = vld [vmem:[#allocation5 + $0x20] sm:$0xff]
        %v276 = vld [vmem:[#allocation5 + $0x28] sm:$0xff]
        %v277 = vld [vmem:[#allocation5 + $0x30] sm:$0xff]
        %v278 = vld [vmem:[#allocation5 + $0x38] sm:$0xff]
        %v279 = vld [vmem:[#allocation5 + $0x40] sm:$0xff]
        %v280 = vld [vmem:[#allocation5 + $0x48] sm:$0xff]
        %v281 = vld [vmem:[#allocation5 + $0x50] sm:$0xff]
        %v282 = vld [vmem:[#allocation5 + $0x58] sm:$0xff]
        %v283 = vld [vmem:[#allocation5 + $0x60] sm:$0xff]
        %v284 = vld [vmem:[#allocation5 + $0x68] sm:$0xff]
        %v285 = vld [vmem:[#allocation5 + $0x70] sm:$0xff]
        %v286 = vld [vmem:[#allocation5 + $0x78] sm:$0xff]
        %v287 = vld [vmem:[#allocation5 + $0x80] sm:$0xff]
        %v288 = vld [vmem:[#allocation5 + $0x88] sm:$0xff]
        %v289 = vld [vmem:[#allocation5 + $0x90] sm:$0xff]
        %v290 = vld [vmem:[#allocation5 + $0x98] sm:$0xff]
        %v291 = vld [vmem:[#allocation5 + $0xa0] sm:$0xff]
        %v292 = vld [vmem:[#allocation5 + $0xa8] sm:$0xff]
        %v293 = vld [vmem:[#allocation5 + $0xb0] sm:$0xff]
        %v294 = vld [vmem:[#allocation5 + $0xb8] sm:$0xff]
        %v295 = vld [vmem:[#allocation5 + $0xc0] sm:$0xff]
        %v296 = vld [vmem:[#allocation5 + $0xc8] sm:$0xff]
        %v297 = vld [vmem:[#allocation5 + $0xd0] sm:$0xff]
        %v298 = vld [vmem:[#allocation5 + $0xd8] sm:$0xff]
        %v299 = vld [vmem:[#allocation5 + $0xe0] sm:$0xff]
        %v300 = vld [vmem:[#allocation5 + $0xe8] sm:$0xff]
        %v301 = vld [vmem:[#allocation5 + $0xf0] sm:$0xff]
        %v302 = vld [vmem:[#allocation5 + $0xf8] sm:$0xff]
        %v303 = vld [vmem:[%s2] sm:$0x3]
        %v305 = vlaneseq
        %v306 = vshrl.u32 %v305, 7
        %v307 = vsub.s32 0, %v306
        %v308 = vrot.slane %v303, %v307
        %v309 = vlaneseq
        %v310 = vshrl.u32 %v309, 7
        %v311 = vsub.s32 1, %v310
        %v312 = vrot.slane %v303, %v311
        %315 = vmatprep.subr.mxu0 %v272
        %316 = vmatpush1.msra.mxu0 %v271
        %317 = vmatprep.subr.mxu0 %v274
        %318 = vmatpush1.msra.mxu0 %v273
        %319 = vmatprep.subr.mxu0 %v276
        %320 = vmatpush1.msra.mxu0 %v275
        %321 = vmatprep.subr.mxu0 %v278
        %322 = vmatpush1.msra.mxu0 %v277
        %323 = vmatprep.subr.mxu0 %v280
        %324 = vmatpush1.msra.mxu0 %v279
        %325 = vmatprep.subr.mxu0 %v282
        %326 = vmatpush1.msra.mxu0 %v281
        %327 = vmatprep.subr.mxu0 %v284
        %328 = vmatpush1.msra.mxu0 %v283
        %329 = vmatprep.subr.mxu0 %v286
        %330 = vmatpush1.msra.mxu0 %v285
        %331 = vmatprep.subr.mxu0 %v288
        %332 = vmatpush1.msra.mxu0 %v287
        %333 = vmatprep.subr.mxu0 %v290
        %334 = vmatpush1.msra.mxu0 %v289
        %335 = vmatprep.subr.mxu0 %v292
        %336 = vmatpush1.msra.mxu0 %v291
        %337 = vmatprep.subr.mxu0 %v294
        %338 = vmatpush1.msra.mxu0 %v293
        %339 = vmatprep.subr.mxu0 %v296
        %340 = vmatpush1.msra.mxu0 %v295
        %341 = vmatprep.subr.mxu0 %v298
        %342 = vmatpush1.msra.mxu0 %v297
        %343 = vmatprep.subr.mxu0 %v300
        %344 = vmatpush1.msra.mxu0 %v299
        %345 = vmatprep.subr.mxu0 %v302
        %346 = vmatpush1.msra.mxu0 %v301
        %347 = vmatprep.subr.mxu0 0.0
        %348 = vmatpush1.msra.mxu0 0.0
        %349 = vmatprep.subr.mxu0 0.0
        %350 = vmatpush1.msra.mxu0 0.0
        %351 = vmatprep.subr.mxu0 0.0
        %352 = vmatpush1.msra.mxu0 0.0
        %353 = vmatprep.subr.mxu0 0.0
        %354 = vmatpush1.msra.mxu0 0.0
        %355 = vmatprep.subr.mxu0 0.0
        %356 = vmatpush1.msra.mxu0 0.0
        %357 = vmatprep.subr.mxu0 0.0
        %358 = vmatpush1.msra.mxu0 0.0
        %359 = vmatprep.subr.mxu0 0.0
        %360 = vmatpush1.msra.mxu0 0.0
        %361 = vmatprep.subr.mxu0 0.0
        %362 = vmatpush1.msra.mxu0 0.0
        %363 = vmatprep.subr.mxu0 0.0
        %364 = vmatpush1.msra.mxu0 0.0
        %365 = vmatprep.subr.mxu0 0.0
        %366 = vmatpush1.msra.mxu0 0.0
        %367 = vmatprep.subr.mxu0 0.0
        %368 = vmatpush1.msra.mxu0 0.0
        %369 = vmatprep.subr.mxu0 0.0
        %370 = vmatpush1.msra.mxu0 0.0
        %371 = vmatprep.subr.mxu0 0.0
        %372 = vmatpush1.msra.mxu0 0.0
        %373 = vmatprep.subr.mxu0 0.0
        %374 = vmatpush1.msra.mxu0 0.0
        %375 = vmatprep.subr.mxu0 0.0
        %376 = vmatpush1.msra.mxu0 0.0
        %377 = vmatprep.subr.mxu0 0.0
        %378 = vmatpush1.msra.mxu0 0.0
        %379 = vmatprep.mubr.f32.mxu0 0.0
        %380 = vmatmul.mubr.f32.gmra.mrb[0].mxu0 %v270
        %v381 = vpop.f32.mrb[0].mxu0
        %v382 = vadd.f32 %v308, %v381
        %v383 = vpop.f32.mrb[0].mxu0
        %v384 = vadd.f32 %v312, %v383
        %385 = vdwg.mxu0
        %v386 = vmax.f32 %v382, 0.0
        %v387 = vmax.f32 %v384, 0.0
        %v388 = vld [vmem:[#allocation7] sm:$0xff]
        %v389 = vld [vmem:[#allocation7 + $0x8] sm:$0xff]
        %v390 = vld [vmem:[#allocation7 + $0x10] sm:$0xff]
        %v391 = vld [vmem:[#allocation7 + $0x18] sm:$0xff]
        %v392 = vld [vmem:[#allocation7 + $0x20] sm:$0xff]
        %v393 = vld [vmem:[#allocation7 + $0x28] sm:$0xff]
        %v394 = vld [vmem:[#allocation7 + $0x30] sm:$0xff]
        %v395 = vld [vmem:[#allocation7 + $0x38] sm:$0xff]
        %v396 = vld [vmem:[#allocation7 + $0x40] sm:$0xff]
        %v397 = vld [vmem:[#allocation7 + $0x48] sm:$0xff]
        %v398 = vld [vmem:[#allocation7 + $0x50] sm:$0xff]
        %v399 = vld [vmem:[#allocation7 + $0x58] sm:$0xff]
        %v400 = vld [vmem:[#allocation7 + $0x60] sm:$0xff]
        %v401 = vld [vmem:[#allocation7 + $0x68] sm:$0xff]
        %v402 = vld [vmem:[#allocation7 + $0x70] sm:$0xff]
        %v403 = vld [vmem:[#allocation7 + $0x78] sm:$0xff]
        %v404 = vld [vmem:[#allocation7 + $0x80] sm:$0xff]
        %v405 = vld [vmem:[#allocation7 + $0x88] sm:$0xff]
        %v406 = vld [vmem:[#allocation7 + $0x90] sm:$0xff]
        %v407 = vld [vmem:[#allocation7 + $0x98] sm:$0xff]
        %v408 = vld [vmem:[#allocation7 + $0xa0] sm:$0xff]
        %v409 = vld [vmem:[#allocation7 + $0xa8] sm:$0xff]
        %v410 = vld [vmem:[#allocation7 + $0xb0] sm:$0xff]
        %v411 = vld [vmem:[#allocation7 + $0xb8] sm:$0xff]
        %v412 = vld [vmem:[#allocation7 + $0xc0] sm:$0xff]
        %v413 = vld [vmem:[#allocation7 + $0xc8] sm:$0xff]
        %v414 = vld [vmem:[#allocation7 + $0xd0] sm:$0xff]
        %v415 = vld [vmem:[#allocation7 + $0xd8] sm:$0xff]
        %v416 = vld [vmem:[#allocation7 + $0xe0] sm:$0xff]
        %v417 = vld [vmem:[#allocation7 + $0xe8] sm:$0xff]
        %v418 = vld [vmem:[#allocation7 + $0xf0] sm:$0xff]
        %v419 = vld [vmem:[#allocation7 + $0xf8] sm:$0xff]
        %v420 = vld [vmem:[%s4] sm:$0x1]
        %v422 = vlaneseq
        %v423 = vshrl.u32 %v422, 7
        %v424 = vsub.s32 0, %v423
        %v425 = vrot.slane %v420, %v424
        %427 = vmatprep.subr.mxu0 0.0
        %428 = vmatpush1.msra.mxu0 %v388
        %429 = vmatprep.subr.mxu0 0.0
        %430 = vmatpush1.msra.mxu0 %v389
        %431 = vmatprep.subr.mxu0 0.0
        %432 = vmatpush1.msra.mxu0 %v390
        %433 = vmatprep.subr.mxu0 0.0
        %434 = vmatpush1.msra.mxu0 %v391
        %435 = vmatprep.subr.mxu0 0.0
        %436 = vmatpush1.msra.mxu0 %v392
        %437 = vmatprep.subr.mxu0 0.0
        %438 = vmatpush1.msra.mxu0 %v393
        %439 = vmatprep.subr.mxu0 0.0
        %440 = vmatpush1.msra.mxu0 %v394
        %441 = vmatprep.subr.mxu0 0.0
        %442 = vmatpush1.msra.mxu0 %v395
        %443 = vmatprep.subr.mxu0 0.0
        %444 = vmatpush1.msra.mxu0 %v396
        %445 = vmatprep.subr.mxu0 0.0
        %446 = vmatpush1.msra.mxu0 %v397
        %447 = vmatprep.subr.mxu0 0.0
        %448 = vmatpush1.msra.mxu0 %v398
        %449 = vmatprep.subr.mxu0 0.0
        %450 = vmatpush1.msra.mxu0 %v399
        %451 = vmatprep.subr.mxu0 0.0
        %452 = vmatpush1.msra.mxu0 %v400
        %453 = vmatprep.subr.mxu0 0.0
        %454 = vmatpush1.msra.mxu0 %v401
        %455 = vmatprep.subr.mxu0 0.0
        %456 = vmatpush1.msra.mxu0 %v402
        %457 = vmatprep.subr.mxu0 0.0
        %458 = vmatpush1.msra.mxu0 %v403
        %459 = vmatprep.subr.mxu0 0.0
        %460 = vmatpush1.msra.mxu0 %v404
        %461 = vmatprep.subr.mxu0 0.0
        %462 = vmatpush1.msra.mxu0 %v405
        %463 = vmatprep.subr.mxu0 0.0
        %464 = vmatpush1.msra.mxu0 %v406
        %465 = vmatprep.subr.mxu0 0.0
        %466 = vmatpush1.msra.mxu0 %v407
        %467 = vmatprep.subr.mxu0 0.0
        %468 = vmatpush1.msra.mxu0 %v408
        %469 = vmatprep.subr.mxu0 0.0
        %470 = vmatpush1.msra.mxu0 %v409
        %471 = vmatprep.subr.mxu0 0.0
        %472 = vmatpush1.msra.mxu0 %v410
        %473 = vmatprep.subr.mxu0 0.0
        %474 = vmatpush1.msra.mxu0 %v411
        %475 = vmatprep.subr.mxu0 0.0
        %476 = vmatpush1.msra.mxu0 %v412
        %477 = vmatprep.subr.mxu0 0.0
        %478 = vmatpush1.msra.mxu0 %v413
        %479 = vmatprep.subr.mxu0 0.0
        %480 = vmatpush1.msra.mxu0 %v414
        %481 = vmatprep.subr.mxu0 0.0
        %482 = vmatpush1.msra.mxu0 %v415
        %483 = vmatprep.subr.mxu0 0.0
        %484 = vmatpush1.msra.mxu0 %v416
        %485 = vmatprep.subr.mxu0 0.0
        %486 = vmatpush1.msra.mxu0 %v417
        %487 = vmatprep.subr.mxu0 0.0
        %488 = vmatpush1.msra.mxu0 %v418
        %489 = vmatprep.subr.mxu0 0.0
        %490 = vmatpush1.msra.mxu0 %v419
        %491 = vmatprep.mubr.f32.mxu0 %v387
        %492 = vmatmul.mubr.f32.gmra.mrb[0].mxu0 %v386
        %v493 = vpop.f32.mrb[0].mxu0
        %v494 = vadd.f32 %v425, %v493
        %v495 = vpop.f32.mrb[0].mxu0
        %496 = vdwg.mxu0
        %497 = vst [vmem:[%s268] sm:$0xff] %v494
        %s498 = sand.u32 %s141, 1
        %s499 = scalar_lea.sflag [#allocation4], %s498
        %s500 = sand.u32 %s141, 1
        %s501 = smul.addr %s500, 8
        %s502 = scalar_lea.vmem [#allocation8], %s501
        // Predicated region
        $region53: #{tpu_custom_call.1} parent=39 // pred_check
          %p503 = pneg %p151
        $region54: #{tpu_custom_call.1} parent=39 // pred_check_branch
          %505 = sbr.rel (%p503) target = $region56
        $region55: #{tpu_custom_call.1} parent=39 // pred_region
          %s507 = ssub.s32 128, 128
          %508 = vsyncadd %s499, %s507
          %s509 = smul.addr %s23, 128
          %s510 = scalar_lea.hbm %s5, %s509
          %s512 = sshll.u32 %s502, 4
          %s513 = int_to_ptr.vmem [resolvable:$true] %s512
          %515 = dma.vmem_to_hbm [thread:$0]  %s513, 128, %s510, %s499
        $region56: #{tpu_custom_call.1} parent=39 // pred_fallthru
          _
      $region40: #{tpu_custom_call.1} parent=5 // pred_fallthru
        _
      %p516 = scmp.le.s32.totalorder 2, %s18
      // Predicated region
      $region57: #{tpu_custom_call.1} parent=5 // pred_check
        %p517 = pneg %p516
      $region58: #{tpu_custom_call.1} parent=5 // pred_check_branch
        %519 = sbr.rel (%p517) target = $region60
      $region59: #{tpu_custom_call.1} parent=5 // pred_region
        %s520 = ssub.s32 %s18, 2
        // Predicated region
        $region61: #{tpu_custom_call.1} parent=59 // pred_check
          %p521 = pneg %p157
        $region62: #{tpu_custom_call.1} parent=59 // pred_check_branch
          %523 = sbr.rel (%p521) target = $region64
        $region63: #{tpu_custom_call.1} parent=59 // pred_region
          %s524 = sand.u32 %s142, 1
          %s525 = scalar_lea.sflag [#allocation4], %s524
          %s526 = sand.u32 %s142, 1
          %s527 = smul.addr %s526, 8
          %s528 = scalar_lea.vmem [#allocation8], %s527
          %529 = dma.done %s525, 128
        $region64: #{tpu_custom_call.1} parent=59 // pred_fallthru
          _
      $region60: #{tpu_custom_call.1} parent=5 // pred_fallthru
        _
    $region6: #{tpu_custom_call.1} parent=1 // loop_footer
      %s22 = sadd.s32 1, %s18
    $region7: #{tpu_custom_call.1} parent=1 // loop_footer_branch
      %17 = sbr.rel target = $region3
    $region8: #{tpu_custom_call.1} parent=1 // loop_exit
      _
    %530 = vsyncpa [#allocation3], 1
    %s531 = scalar_lea.sflag [#allocation3], 1
    %532 = vsyncpa %s531, 1
    %533 = vsyncpa [#allocation6], 1
    %534 = vsyncpa [#allocation4], 1
    %s535 = scalar_lea.sflag [#allocation4], 1
    %536 = vsyncpa %s535, 1

</llo_original>
